<compile_context>
chip_gen: v5e
topology: v5e:2x2
jax: 0.10.0
libtpu: 0.0.40
codegen_flags: <defaults>
</compile_context>

<pallas_src>
import functools

import jax
import jax.numpy as jnp
from jax.experimental import pallas as pl
from jax.experimental.pallas import tpu as pltpu

NUM_BLOCKS = 2
INPUT_DIM = 16
OUTPUT_DIM = 8
HIDDEN_DIM = 32
IN_FEATURES = INPUT_DIM + 128   # 144


def _round_up(x, m):
    return (x + m - 1) // m * m


def mlp_resnet_kernel(x_ref, fcw_ref, fcb_ref,
                      w1_ref, b1_ref, w2_ref, b2_ref,
                      ow_ref, ob_ref, o_ref, *, num_blocks):
    # In-kernel bf16 cast of the streamed activations (cheap VPU op hidden under
    # DMA/MXU; avoids a separate wrapper-side XLA cast pass over x in HBM).
    x = x_ref[...].astype(jnp.bfloat16)

    # Stem: h = fc(x), f32 accumulator.
    h = jnp.dot(x, fcw_ref[...],
                preferred_element_type=jnp.float32) + fcb_ref[...]

    # Residual MLP blocks: h = h + fc2(relu(fc1(h)))
    # (residual Linear is never taken: shapes always match; dropout/layernorm disabled)
    for blk in range(num_blocks):  # static unroll over the tiny block count
        y = jnp.dot(h.astype(jnp.bfloat16), w1_ref[blk],
                    preferred_element_type=jnp.float32) + b1_ref[blk]
        y = jnp.maximum(y, 0.0)                      # ReLU (f32, VPU)
        y = jnp.dot(y.astype(jnp.bfloat16), w2_ref[blk],
                    preferred_element_type=jnp.float32) + b2_ref[blk]
        h = h + y

    # Head: relu then out_fc.  Narrow (TB, OUTPUT_DIM) store: HBM writeback is ~16x
    # smaller than a 128-lane-padded f32 slab and no wrapper lane-slice pass is needed.
    h = jnp.maximum(h, 0.0)
    o_ref[...] = (jnp.dot(h.astype(jnp.bfloat16), ow_ref[...],
                          preferred_element_type=jnp.float32)
                  + ob_ref[...]).astype(o_ref.dtype)


def mlp_resnet_forward(x, params, *, block_b=4096, min_grid_steps=2):
    """x: (B, IN_FEATURES) f32 (or bf16).  Returns (B, OUTPUT_DIM) f32."""
    fcw, fcb, w1, b1, w2, b2, ow, ob = params
    B = x.shape[0]

    # ---- adaptive batch tiling ----
    B8 = _round_up(B, 8)                     # minimal sublane alignment
    TB = min(block_b, B8)
    n_steps = pl.cdiv(B8, TB)
    # v7x megacore: the batch axis is sharded across the two TensorCores only via the
    # grid, so keep >=2 grid steps whenever the batch is big enough to split usefully.
    if n_steps < min_grid_steps and B8 >= min_grid_steps * 1024:
        n_steps = min_grid_steps
    # Balance tiles and keep padding tiny (< 8 * n_steps rows); for batches that are
    # already multiples of 8 and divide evenly, B_pad == B and no pad copy happens.
    TB = _round_up(pl.cdiv(B8, n_steps), 8)
    B_pad = TB * n_steps

    if B_pad != B:
        x = jnp.pad(x, ((0, B_pad - B), (0, 0)))

    grid = (n_steps,)

    out = pl.pallas_call(
        functools.partial(mlp_resnet_kernel, num_blocks=NUM_BLOCKS),
        out_shape=jax.ShapeDtypeStruct((B_pad, OUTPUT_DIM), jnp.float32),
        grid=grid,
        in_specs=[
            # streamed activations (kept in caller dtype; cast to bf16 in-kernel)
            pl.BlockSpec((TB, IN_FEATURES), lambda i: (i, 0)),
            # weights/biases: whole-array blocks, constant index_map -> VMEM-resident
            pl.BlockSpec((IN_FEATURES, HIDDEN_DIM), lambda i: (0, 0)),
            pl.BlockSpec((1, HIDDEN_DIM), lambda i: (0, 0)),
            pl.BlockSpec((NUM_BLOCKS, HIDDEN_DIM, 4 * HIDDEN_DIM), lambda i: (0, 0, 0)),
            pl.BlockSpec((NUM_BLOCKS, 1, 4 * HIDDEN_DIM), lambda i: (0, 0, 0)),
            pl.BlockSpec((NUM_BLOCKS, 4 * HIDDEN_DIM, HIDDEN_DIM), lambda i: (0, 0, 0)),
            pl.BlockSpec((NUM_BLOCKS, 1, HIDDEN_DIM), lambda i: (0, 0, 0)),
            pl.BlockSpec((HIDDEN_DIM, OUTPUT_DIM), lambda i: (0, 0)),
            pl.BlockSpec((1, OUTPUT_DIM), lambda i: (0, 0)),
        ],
        out_specs=pl.BlockSpec((TB, OUTPUT_DIM), lambda i: (i, 0)),
        compiler_params=pltpu.CompilerParams(
            dimension_semantics=("parallel",),
            # above v5e's 16 MiB / v6e+v7x's 32 MiB scoped defaults,
            # below v7x's 64 MiB physical VMEM.
            vmem_limit_bytes=48 * 1024 * 1024),
    )(x, fcw, fcb, w1, b1, w2, b2, ow, ob)

    return out if B_pad == B else out[:B]


def init_linear(key, fan_in, fan_out):
    """PyTorch nn.Linear-style init: U(-1/sqrt(fan_in), 1/sqrt(fan_in))."""
    kw, kb = jax.random.split(key)
    bound = 1.0 / jnp.sqrt(fan_in)
    w = jax.random.uniform(kw, (fan_in, fan_out), jnp.float32, -bound, bound)
    b = jax.random.uniform(kb, (fan_out,), jnp.float32, -bound, bound)
    return w, b


def make_params(key):
    """Kernel-ready params: bf16 weights, f32 (1, D) biases."""
    keys = jax.random.split(key, 2 + NUM_BLOCKS)
    fcw, fcb = init_linear(keys[0], IN_FEATURES, HIDDEN_DIM)
    w1s, b1s, w2s, b2s = [], [], [], []
    for i in range(NUM_BLOCKS):
        kw1, kw2 = jax.random.split(keys[1 + i])
        w1, b1 = init_linear(kw1, HIDDEN_DIM, HIDDEN_DIM * 4)
        w2, b2 = init_linear(kw2, HIDDEN_DIM * 4, HIDDEN_DIM)
        w1s.append(w1); b1s.append(b1[None, :])
        w2s.append(w2); b2s.append(b2[None, :])
    ow, ob = init_linear(keys[-1], HIDDEN_DIM, OUTPUT_DIM)

    return (fcw.astype(jnp.bfloat16), fcb[None, :],
            jnp.stack(w1s).astype(jnp.bfloat16), jnp.stack(b1s),
            jnp.stack(w2s).astype(jnp.bfloat16), jnp.stack(b2s),
            ow.astype(jnp.bfloat16), ob[None, :])


def reference_forward(x, params):
    """Pure-JAX reference mirroring the PyTorch forward at the kernel's precision
    (bf16 matmul inputs, f32 accumulation/bias/ReLU/residual)."""
    fcw, fcb, w1, b1, w2, b2, ow, ob = params
    h = jnp.dot(x.astype(jnp.bfloat16), fcw,
                preferred_element_type=jnp.float32) + fcb
    for i in range(NUM_BLOCKS):
        y = jnp.dot(h.astype(jnp.bfloat16), w1[i],
                    preferred_element_type=jnp.float32) + b1[i]
        y = jnp.maximum(y, 0.0)
        y = jnp.dot(y.astype(jnp.bfloat16), w2[i],
                    preferred_element_type=jnp.float32) + b2[i]
        h = h + y
    h = jnp.maximum(h, 0.0)
    return jnp.dot(h.astype(jnp.bfloat16), ow,
                   preferred_element_type=jnp.float32) + ob


if __name__ == "__main__":
    key = jax.random.PRNGKey(0)
    k_x, k_p = jax.random.split(key)
    B = 2
    x = jax.random.normal(k_x, (B, IN_FEATURES), jnp.float32)
    params = make_params(k_p)

    out = mlp_resnet_forward(x, params)
    out = jax.block_until_ready(out)

    ref = reference_forward(x, params)
    assert out.shape == (B, OUTPUT_DIM)
    assert jnp.allclose(out, ref, atol=2e-3, rtol=2e-3), "mismatch vs reference"

    print("KERNEL_OK")
</pallas_src>

<mosaic_0001>
module attributes {stable_mosaic.version = 11 : i64} {
  func.func @mlp_resnet_kernel(%arg0: i32, %arg1: memref<8x144xf32, #tpu.memory_space<vmem>>, %arg2: memref<144x32xbf16, #tpu.memory_space<vmem>>, %arg3: memref<1x32xf32, #tpu.memory_space<vmem>>, %arg4: memref<2x32x128xbf16, #tpu.memory_space<vmem>>, %arg5: memref<2x1x128xf32, #tpu.memory_space<vmem>>, %arg6: memref<2x128x32xbf16, #tpu.memory_space<vmem>>, %arg7: memref<2x1x32xf32, #tpu.memory_space<vmem>>, %arg8: memref<32x8xbf16, #tpu.memory_space<vmem>>, %arg9: memref<1x8xf32, #tpu.memory_space<vmem>>, %arg10: memref<8x8xf32, #tpu.memory_space<vmem>>) attributes {dimension_semantics = [#tpu.dimension_semantics<parallel>], iteration_bounds = array<i64: 1>, scalar_prefetch = 0 : i64, scratch_operands = 0 : i64, tpu.core_type = #tpu.core_type<tc>, window_params = [{transform_indices = @transform_0, window_bounds = array<i64: 8, 144>}, {pipeline_mode = #tpu.pipeline_mode<synchronous>, transform_indices = @transform_1, window_bounds = array<i64: 144, 32>}, {pipeline_mode = #tpu.pipeline_mode<synchronous>, transform_indices = @transform_2, window_bounds = array<i64: 1, 32>}, {pipeline_mode = #tpu.pipeline_mode<synchronous>, transform_indices = @transform_3, window_bounds = array<i64: 2, 32, 128>}, {pipeline_mode = #tpu.pipeline_mode<synchronous>, transform_indices = @transform_4, window_bounds = array<i64: 2, 1, 128>}, {pipeline_mode = #tpu.pipeline_mode<synchronous>, transform_indices = @transform_5, window_bounds = array<i64: 2, 128, 32>}, {pipeline_mode = #tpu.pipeline_mode<synchronous>, transform_indices = @transform_6, window_bounds = array<i64: 2, 1, 32>}, {pipeline_mode = #tpu.pipeline_mode<synchronous>, transform_indices = @transform_7, window_bounds = array<i64: 32, 8>}, {pipeline_mode = #tpu.pipeline_mode<synchronous>, transform_indices = @transform_8, window_bounds = array<i64: 1, 8>}, {transform_indices = @transform_9, window_bounds = array<i64: 8, 8>}]} {
    %c0 = arith.constant 0 : index
    %c0_0 = arith.constant 0 : index
    %0 = vector.load %arg1[%c0, %c0_0] : memref<8x144xf32, #tpu.memory_space<vmem>>, vector<8x144xf32>
    %1 = arith.truncf %0 : vector<8x144xf32> to vector<8x144xbf16>
    %c0_1 = arith.constant 0 : index
    %c0_2 = arith.constant 0 : index
    %2 = vector.load %arg2[%c0_1, %c0_2] : memref<144x32xbf16, #tpu.memory_space<vmem>>, vector<144x32xbf16>
    %cst = arith.constant dense<0.000000e+00> : vector<8x32xf32>
    %3 = tpu.matmul %1, %2, %cst {dimension_numbers = #tpu.dot_dimension_numbers<[1], [0], [0], [1], [0, 0, 1, 1], [], []>} : vector<8x144xbf16>, vector<144x32xbf16>, vector<8x32xf32> -> vector<8x32xf32>
    %c0_3 = arith.constant 0 : index
    %c0_4 = arith.constant 0 : index
    %4 = vector.load %arg3[%c0_3, %c0_4] : memref<1x32xf32, #tpu.memory_space<vmem>>, vector<1x32xf32>
    %5 = vector.broadcast %4 : vector<1x32xf32> to vector<8x32xf32>
    %6 = arith.addf %3, %5 : vector<8x32xf32>
    %7 = arith.truncf %6 : vector<8x32xf32> to vector<8x32xbf16>
    %c0_5 = arith.constant 0 : index
    %c0_6 = arith.constant 0 : index
    %c0_7 = arith.constant 0 : index
    %8 = vector.load %arg4[%c0_5, %c0_6, %c0_7] : memref<2x32x128xbf16, #tpu.memory_space<vmem>>, vector<1x32x128xbf16>
    %9 = vector.shape_cast %8 : vector<1x32x128xbf16> to vector<32x128xbf16>
    %cst_8 = arith.constant dense<0.000000e+00> : vector<8x128xf32>
    %10 = tpu.matmul %7, %9, %cst_8 {dimension_numbers = #tpu.dot_dimension_numbers<[1], [0], [0], [1], [0, 0, 1, 1], [], []>} : vector<8x32xbf16>, vector<32x128xbf16>, vector<8x128xf32> -> vector<8x128xf32>
    %c0_9 = arith.constant 0 : index
    %c0_10 = arith.constant 0 : index
    %c0_11 = arith.constant 0 : index
    %11 = vector.load %arg5[%c0_9, %c0_10, %c0_11] : memref<2x1x128xf32, #tpu.memory_space<vmem>>, vector<1x1x128xf32>
    %12 = vector.shape_cast %11 : vector<1x1x128xf32> to vector<1x128xf32>
    %13 = vector.broadcast %12 : vector<1x128xf32> to vector<8x128xf32>
    %14 = arith.addf %10, %13 : vector<8x128xf32>
    %cst_12 = arith.constant 0.000000e+00 : f32
    %15 = vector.broadcast %cst_12 : f32 to vector<8x128xf32>
    %16 = arith.maximumf %14, %15 : vector<8x128xf32>
    %17 = arith.truncf %16 : vector<8x128xf32> to vector<8x128xbf16>
    %c0_13 = arith.constant 0 : index
    %c0_14 = arith.constant 0 : index
    %c0_15 = arith.constant 0 : index
    %18 = vector.load %arg6[%c0_13, %c0_14, %c0_15] : memref<2x128x32xbf16, #tpu.memory_space<vmem>>, vector<1x128x32xbf16>
    %19 = vector.shape_cast %18 : vector<1x128x32xbf16> to vector<128x32xbf16>
    %cst_16 = arith.constant dense<0.000000e+00> : vector<8x32xf32>
    %20 = tpu.matmul %17, %19, %cst_16 {dimension_numbers = #tpu.dot_dimension_numbers<[1], [0], [0], [1], [0, 0, 1, 1], [], []>} : vector<8x128xbf16>, vector<128x32xbf16>, vector<8x32xf32> -> vector<8x32xf32>
    %c0_17 = arith.constant 0 : index
    %c0_18 = arith.constant 0 : index
    %c0_19 = arith.constant 0 : index
    %21 = vector.load %arg7[%c0_17, %c0_18, %c0_19] : memref<2x1x32xf32, #tpu.memory_space<vmem>>, vector<1x1x32xf32>
    %22 = vector.shape_cast %21 : vector<1x1x32xf32> to vector<1x32xf32>
    %23 = vector.broadcast %22 : vector<1x32xf32> to vector<8x32xf32>
    %24 = arith.addf %20, %23 : vector<8x32xf32>
    %25 = arith.addf %6, %24 : vector<8x32xf32>
    %26 = arith.truncf %25 : vector<8x32xf32> to vector<8x32xbf16>
    %c1 = arith.constant 1 : index
    %c0_20 = arith.constant 0 : index
    %c0_21 = arith.constant 0 : index
    %27 = vector.load %arg4[%c1, %c0_20, %c0_21] : memref<2x32x128xbf16, #tpu.memory_space<vmem>>, vector<1x32x128xbf16>
    %28 = vector.shape_cast %27 : vector<1x32x128xbf16> to vector<32x128xbf16>
    %cst_22 = arith.constant dense<0.000000e+00> : vector<8x128xf32>
    %29 = tpu.matmul %26, %28, %cst_22 {dimension_numbers = #tpu.dot_dimension_numbers<[1], [0], [0], [1], [0, 0, 1, 1], [], []>} : vector<8x32xbf16>, vector<32x128xbf16>, vector<8x128xf32> -> vector<8x128xf32>
    %c1_23 = arith.constant 1 : index
    %c0_24 = arith.constant 0 : index
    %c0_25 = arith.constant 0 : index
    %30 = vector.load %arg5[%c1_23, %c0_24, %c0_25] : memref<2x1x128xf32, #tpu.memory_space<vmem>>, vector<1x1x128xf32>
    %31 = vector.shape_cast %30 : vector<1x1x128xf32> to vector<1x128xf32>
    %32 = vector.broadcast %31 : vector<1x128xf32> to vector<8x128xf32>
    %33 = arith.addf %29, %32 : vector<8x128xf32>
    %cst_26 = arith.constant 0.000000e+00 : f32
    %34 = vector.broadcast %cst_26 : f32 to vector<8x128xf32>
    %35 = arith.maximumf %33, %34 : vector<8x128xf32>
    %36 = arith.truncf %35 : vector<8x128xf32> to vector<8x128xbf16>
    %c1_27 = arith.constant 1 : index
    %c0_28 = arith.constant 0 : index
    %c0_29 = arith.constant 0 : index
    %37 = vector.load %arg6[%c1_27, %c0_28, %c0_29] : memref<2x128x32xbf16, #tpu.memory_space<vmem>>, vector<1x128x32xbf16>
    %38 = vector.shape_cast %37 : vector<1x128x32xbf16> to vector<128x32xbf16>
    %cst_30 = arith.constant dense<0.000000e+00> : vector<8x32xf32>
    %39 = tpu.matmul %36, %38, %cst_30 {dimension_numbers = #tpu.dot_dimension_numbers<[1], [0], [0], [1], [0, 0, 1, 1], [], []>} : vector<8x128xbf16>, vector<128x32xbf16>, vector<8x32xf32> -> vector<8x32xf32>
    %c1_31 = arith.constant 1 : index
    %c0_32 = arith.constant 0 : index
    %c0_33 = arith.constant 0 : index
    %40 = vector.load %arg7[%c1_31, %c0_32, %c0_33] : memref<2x1x32xf32, #tpu.memory_space<vmem>>, vector<1x1x32xf32>
    %41 = vector.shape_cast %40 : vector<1x1x32xf32> to vector<1x32xf32>
    %42 = vector.broadcast %41 : vector<1x32xf32> to vector<8x32xf32>
    %43 = arith.addf %39, %42 : vector<8x32xf32>
    %44 = arith.addf %25, %43 : vector<8x32xf32>
    %cst_34 = arith.constant 0.000000e+00 : f32
    %45 = vector.broadcast %cst_34 : f32 to vector<8x32xf32>
    %46 = arith.maximumf %44, %45 : vector<8x32xf32>
    %47 = arith.truncf %46 : vector<8x32xf32> to vector<8x32xbf16>
    %c0_35 = arith.constant 0 : index
    %c0_36 = arith.constant 0 : index
    %48 = vector.load %arg8[%c0_35, %c0_36] : memref<32x8xbf16, #tpu.memory_space<vmem>>, vector<32x8xbf16>
    %cst_37 = arith.constant dense<0.000000e+00> : vector<8x8xf32>
    %49 = tpu.matmul %47, %48, %cst_37 {dimension_numbers = #tpu.dot_dimension_numbers<[1], [0], [0], [1], [0, 0, 1, 1], [], []>} : vector<8x32xbf16>, vector<32x8xbf16>, vector<8x8xf32> -> vector<8x8xf32>
    %c0_38 = arith.constant 0 : index
    %c0_39 = arith.constant 0 : index
    %50 = vector.load %arg9[%c0_38, %c0_39] : memref<1x8xf32, #tpu.memory_space<vmem>>, vector<1x8xf32>
    %51 = vector.broadcast %50 : vector<1x8xf32> to vector<8x8xf32>
    %52 = arith.addf %49, %51 : vector<8x8xf32>
    %c0_40 = arith.constant 0 : index
    %c0_41 = arith.constant 0 : index
    %53 = vector.load %arg10[%c0_40, %c0_41] : memref<8x8xf32, #tpu.memory_space<vmem>>, vector<8x8xf32>
    tpu.vector_store %arg10[%c0_40, %c0_41], %52 {strides = array<i32>} : memref<8x8xf32, #tpu.memory_space<vmem>>, vector<8x8xf32>,
    return
  }
  func.func @transform_0(%arg0: i32) -> (i32, i32) {
    %c0_i32 = arith.constant 0 : i32
    %c0_i32_0 = arith.constant 0 : i32
    return %arg0, %c0_i32 : i32, i32
  }
  func.func @transform_1(%arg0: i32) -> (i32, i32) {
    %c0_i32 = arith.constant 0 : i32
    %c0_i32_0 = arith.constant 0 : i32
    %c0_i32_1 = arith.constant 0 : i32
    return %c0_i32, %c0_i32_0 : i32, i32
  }
  func.func @transform_2(%arg0: i32) -> (i32, i32) {
    %c0_i32 = arith.constant 0 : i32
    %c0_i32_0 = arith.constant 0 : i32
    %c0_i32_1 = arith.constant 0 : i32
    return %c0_i32, %c0_i32_0 : i32, i32
  }
  func.func @transform_3(%arg0: i32) -> (i32, i32, i32) {
    %c0_i32 = arith.constant 0 : i32
    %c0_i32_0 = arith.constant 0 : i32
    %c0_i32_1 = arith.constant 0 : i32
    %c0_i32_2 = arith.constant 0 : i32
    return %c0_i32, %c0_i32_0, %c0_i32_1 : i32, i32, i32
  }
  func.func @transform_4(%arg0: i32) -> (i32, i32, i32) {
    %c0_i32 = arith.constant 0 : i32
    %c0_i32_0 = arith.constant 0 : i32
    %c0_i32_1 = arith.constant 0 : i32
    %c0_i32_2 = arith.constant 0 : i32
    return %c0_i32, %c0_i32_0, %c0_i32_1 : i32, i32, i32
  }
  func.func @transform_5(%arg0: i32) -> (i32, i32, i32) {
    %c0_i32 = arith.constant 0 : i32
    %c0_i32_0 = arith.constant 0 : i32
    %c0_i32_1 = arith.constant 0 : i32
    %c0_i32_2 = arith.constant 0 : i32
    return %c0_i32, %c0_i32_0, %c0_i32_1 : i32, i32, i32
  }
  func.func @transform_6(%arg0: i32) -> (i32, i32, i32) {
    %c0_i32 = arith.constant 0 : i32
    %c0_i32_0 = arith.constant 0 : i32
    %c0_i32_1 = arith.constant 0 : i32
    %c0_i32_2 = arith.constant 0 : i32
    return %c0_i32, %c0_i32_0, %c0_i32_1 : i32, i32, i32
  }
  func.func @transform_7(%arg0: i32) -> (i32, i32) {
    %c0_i32 = arith.constant 0 : i32
    %c0_i32_0 = arith.constant 0 : i32
    %c0_i32_1 = arith.constant 0 : i32
    return %c0_i32, %c0_i32_0 : i32, i32
  }
  func.func @transform_8(%arg0: i32) -> (i32, i32) {
    %c0_i32 = arith.constant 0 : i32
    %c0_i32_0 = arith.constant 0 : i32
    %c0_i32_1 = arith.constant 0 : i32
    return %c0_i32, %c0_i32_0 : i32, i32
  }
  func.func @transform_9(%arg0: i32) -> (i32, i32) {
    %c0_i32 = arith.constant 0 : i32
    %c0_i32_0 = arith.constant 0 : i32
    return %arg0, %c0_i32 : i32, i32
  }
}

</mosaic_0001>

<llo_original>
// kernel: tpu_custom_call.1
$region0: #{tpu_custom_call.1}
  #allocation0 [shape = 'u32[]', space=smem, size = 0x4, offset = 0x4, fixed_abs, tag = 'smem constant byte address 0x4 - core index']
  #allocation1 [shape = 'u32[72,128]{1,0:T(1,128)}', space=vmem, size = 0x9000, scoped, tag = 'internal scratch']
  %s0 = inlined_call_operand.vmem [shape: f32[8,144], index: 0, kind: input, shape index: {}]
  %s1 = inlined_call_operand.vmem [shape: bf16[144,32], index: 1, kind: input, shape index: {}]
  %s2 = inlined_call_operand.vmem [shape: f32[1,32], index: 2, kind: input, shape index: {}]
  %s3 = inlined_call_operand.vmem [shape: bf16[2,32,128], index: 3, kind: input, shape index: {}]
  %s4 = inlined_call_operand.vmem [shape: f32[2,1,128], index: 4, kind: input, shape index: {}]
  %s5 = inlined_call_operand.vmem [shape: bf16[2,128,32], index: 5, kind: input, shape index: {}]
  %s6 = inlined_call_operand.vmem [shape: f32[2,1,32], index: 6, kind: input, shape index: {}]
  %s7 = inlined_call_operand.vmem [shape: bf16[32,8], index: 7, kind: input, shape index: {}]
  %s8 = inlined_call_operand.vmem [shape: f32[1,8], index: 8, kind: input, shape index: {}]
  %s9 = inlined_call_operand.hbm [shape: f32[8,8], index: 9, kind: output, shape index: {}]
  %s10 = sld [smem:[#allocation0]]
  $region46: #{tpu_custom_call.1} parent=0
    _
  %s12 = ssub.s32 1, %s10
  %s13 = scalar_select 0, %s12, %s10
  $region1: #{tpu_custom_call.1} parent=0
    #allocation2 [shape = 'u8[4096]{0}', space=vmem, size = 0x1000, scoped, tag = 'output window, operand 0, single buffered']
    #allocation3 [shape = 's32[1]{0}', space=sflag, size = 0x4, scoped, tag = 'scoped memory for tpu_custom_call.1']
    %14 = vsyncpa [#allocation3], 0
    // Predicated region
    $region2: #{tpu_custom_call.1} parent=1 // pred_check
      _
    $region3: #{tpu_custom_call.1} parent=1 // pred_check_branch
      %16 = sbr.rel (0) target = $region5
    $region4: #{tpu_custom_call.1} parent=1 // pred_region
      _
    $region5: #{tpu_custom_call.1} parent=1 // pred_fallthru
      _
    // Predicated region
    $region6: #{tpu_custom_call.1} parent=1 // pred_check
      _
    $region7: #{tpu_custom_call.1} parent=1 // pred_check_branch
      %18 = sbr.rel (0) target = $region9
    $region8: #{tpu_custom_call.1} parent=1 // pred_region
      _
    $region9: #{tpu_custom_call.1} parent=1 // pred_fallthru
      _
    // Predicated region
    $region10: #{tpu_custom_call.1} parent=1 // pred_check
      _
    $region11: #{tpu_custom_call.1} parent=1 // pred_check_branch
      %20 = sbr.rel (0) target = $region13
    $region12: #{tpu_custom_call.1} parent=1 // pred_region
      _
    $region13: #{tpu_custom_call.1} parent=1 // pred_fallthru
      _
    // Predicated region
    $region14: #{tpu_custom_call.1} parent=1 // pred_check
      _
    $region15: #{tpu_custom_call.1} parent=1 // pred_check_branch
      %22 = sbr.rel (0) target = $region17
    $region16: #{tpu_custom_call.1} parent=1 // pred_region
      _
    $region17: #{tpu_custom_call.1} parent=1 // pred_fallthru
      _
    // Predicated region
    $region18: #{tpu_custom_call.1} parent=1 // pred_check
      _
    $region19: #{tpu_custom_call.1} parent=1 // pred_check_branch
      %24 = sbr.rel (0) target = $region21
    $region20: #{tpu_custom_call.1} parent=1 // pred_region
      _
    $region21: #{tpu_custom_call.1} parent=1 // pred_fallthru
      _
    // Predicated region
    $region22: #{tpu_custom_call.1} parent=1 // pred_check
      _
    $region23: #{tpu_custom_call.1} parent=1 // pred_check_branch
      %26 = sbr.rel (0) target = $region25
    $region24: #{tpu_custom_call.1} parent=1 // pred_region
      _
    $region25: #{tpu_custom_call.1} parent=1 // pred_fallthru
      _
    // Predicated region
    $region26: #{tpu_custom_call.1} parent=1 // pred_check
      _
    $region27: #{tpu_custom_call.1} parent=1 // pred_check_branch
      %28 = sbr.rel (0) target = $region29
    $region28: #{tpu_custom_call.1} parent=1 // pred_region
      _
    $region29: #{tpu_custom_call.1} parent=1 // pred_fallthru
      _
    // Predicated region
    $region30: #{tpu_custom_call.1} parent=1 // pred_check
      _
    $region31: #{tpu_custom_call.1} parent=1 // pred_check_branch
      %30 = sbr.rel (0) target = $region33
    $region32: #{tpu_custom_call.1} parent=1 // pred_region
      _
    $region33: #{tpu_custom_call.1} parent=1 // pred_fallthru
      _
    // Predicated region
    $region34: #{tpu_custom_call.1} parent=1 // pred_check
      _
    $region35: #{tpu_custom_call.1} parent=1 // pred_check_branch
      %32 = sbr.rel (0) target = $region37
    $region36: #{tpu_custom_call.1} parent=1 // pred_region
      _
    $region37: #{tpu_custom_call.1} parent=1 // pred_fallthru
      _
    %v34 = vld [vmem:[%s0] sm:$0xff]
    %v35 = vld [vmem:[%s0 + $0x8] sm:$0xff]
    %v36 = vpack.c.bf16 %v34, %v34
    %v37 = vpack.c.bf16 %v35, %v35
    %v38 = vld [vmem:[%s1] sm:$0xf]
    %v39 = vld [vmem:[%s1 + $0x4] sm:$0xf]
    %v40 = vld [vmem:[%s1 + $0x8] sm:$0xf]
    %v41 = vld [vmem:[%s1 + $0xc] sm:$0xf]
    %v42 = vld [vmem:[%s1 + $0x10] sm:$0xf]
    %v43 = vld [vmem:[%s1 + $0x14] sm:$0xf]
    %v44 = vld [vmem:[%s1 + $0x18] sm:$0xf]
    %v45 = vld [vmem:[%s1 + $0x1c] sm:$0xf]
    %v46 = vld [vmem:[%s1 + $0x20] sm:$0xf]
    %v47 = vld [vmem:[%s1 + $0x24] sm:$0xf]
    %v48 = vld [vmem:[%s1 + $0x28] sm:$0xf]
    %v49 = vld [vmem:[%s1 + $0x2c] sm:$0xf]
    %v50 = vld [vmem:[%s1 + $0x30] sm:$0xf]
    %v51 = vld [vmem:[%s1 + $0x34] sm:$0xf]
    %v52 = vld [vmem:[%s1 + $0x38] sm:$0xf]
    %v53 = vld [vmem:[%s1 + $0x3c] sm:$0xf]
    %v54 = vld [vmem:[%s1 + $0x40] sm:$0xf]
    %v55 = vld [vmem:[%s1 + $0x44] sm:$0xf]
    %v56 = vld [vmem:[%s2] sm:$0x1]
    %v58 = vperm.slane %v56, 0
    %v78 = vunpack.c.l.b16 %v38
    %v79 = vunpack.c.l.b16 %v39
    %v80 = vunpack.c.l.b16 %v40
    %v81 = vunpack.c.l.b16 %v41
    %v82 = vunpack.c.l.b16 %v42
    %v83 = vunpack.c.l.b16 %v43
    %v84 = vunpack.c.l.b16 %v44
    %v85 = vunpack.c.l.b16 %v45
    %v86 = vunpack.c.l.b16 %v46
    %v87 = vunpack.c.l.b16 %v47
    %v88 = vunpack.c.l.b16 %v48
    %v89 = vunpack.c.l.b16 %v49
    %v90 = vunpack.c.l.b16 %v50
    %v91 = vunpack.c.l.b16 %v51
    %v92 = vunpack.c.l.b16 %v52
    %v93 = vunpack.c.l.b16 %v53
    %v94 = vunpack.c.l.b16 %v54
    %v95 = vunpack.c.l.b16 %v55
    %v96 = vpack.c.b16 %v79, %v78
    %v97 = vpack.c.b16 %v81, %v80
    %v98 = vpack.c.b16 %v83, %v82
    %v99 = vpack.c.b16 %v85, %v84
    %v100 = vpack.c.b16 %v87, %v86
    %v101 = vpack.c.b16 %v89, %v88
    %v102 = vpack.c.b16 %v91, %v90
    %v103 = vpack.c.b16 %v93, %v92
    %v104 = vpack.c.b16 %v95, %v94
    %vm114 = vcmask 130048
    %v116 = vsel %vm114, %v37, 0
    %118 = vmatpush.bf16.msra.mxu0 %v103
    %119 = vmatpush.bf16.msra.mxu0 %v102
    %120 = vmatpush.bf16.msra.mxu0 %v101
    %121 = vmatpush.bf16.msra.mxu0 %v100
    %122 = vmatpush.bf16.msra.mxu0 %v99
    %123 = vmatpush.bf16.msra.mxu0 %v98
    %124 = vmatpush.bf16.msra.mxu0 %v97
    %125 = vmatpush.bf16.msra.mxu0 %v96
    %126 = vmatmul.bf16.gmra.mxu0 %v36
    %v127 = vpop.f32.mrf.mxu0
    %v128 = vadd.f32 %v58, %v127
    %v129 = vpop.f32.mrf.mxu0
    %130 = vdwg.mxu0
    %131 = vmatpush.bf16.msra.mxu0 0
    %132 = vmatpush.bf16.msra.mxu0 0
    %133 = vmatpush.bf16.msra.mxu0 0
    %134 = vmatpush.bf16.msra.mxu0 0
    %135 = vmatpush.bf16.msra.mxu0 0
    %136 = vmatpush.bf16.msra.mxu0 0
    %137 = vmatpush.bf16.msra.mxu0 0
    %138 = vmatpush.bf16.msra.mxu0 %v104
    %139 = vmatmul.bf16.gmra.mxu0 %v116
    %v140 = vpop.f32.mrf.mxu0
    %v141 = vadd.f32 %v128, %v140
    %v142 = vpop.f32.mrf.mxu0
    %143 = vdwg.mxu0
    %v144 = vpack.c.bf16 %v141, %v141
    %v145 = vld [vmem:[%s3] sm:$0xf]
    %v146 = vld [vmem:[%s3 + $0x4] sm:$0xf]
    %v147 = vld [vmem:[%s3 + $0x8] sm:$0xf]
    %v148 = vld [vmem:[%s3 + $0xc] sm:$0xf]
    %v149 = vld [vmem:[%s4] sm:$0x1]
    %v151 = vperm.slane %v149, 0
    %v157 = vunpack.c.l.b16 %v145
    %v158 = vunpack.c.l.b16 %v146
    %v159 = vunpack.c.l.b16 %v147
    %v160 = vunpack.c.l.b16 %v148
    %v161 = vpack.c.b16 %v158, %v157
    %v162 = vpack.c.b16 %v160, %v159
    %vm165 = vcmask 261120
    %v167 = vsel %vm165, %v144, 0
    %169 = vmatpush.bf16.msra.mxu0 0
    %170 = vmatpush.bf16.msra.mxu0 0
    %171 = vmatpush.bf16.msra.mxu0 0
    %172 = vmatpush.bf16.msra.mxu0 0
    %173 = vmatpush.bf16.msra.mxu0 0
    %174 = vmatpush.bf16.msra.mxu0 0
    %175 = vmatpush.bf16.msra.mxu0 %v162
    %176 = vmatpush.bf16.msra.mxu0 %v161
    %177 = vmatmul.bf16.gmra.mxu0 %v167
    %v178 = vpop.f32.mrf.mxu0
    %v179 = vadd.f32 %v151, %v178
    %v180 = vpop.f32.mrf.mxu0
    %181 = vdwg.mxu0
    %v182 = vmax.f32 %v179, 0.0
    %v183 = vpack.c.bf16 %v182, %v182
    %v184 = vld [vmem:[%s5] sm:$0xf]
    %v185 = vld [vmem:[%s5 + $0x4] sm:$0xf]
    %v186 = vld [vmem:[%s5 + $0x8] sm:$0xf]
    %v187 = vld [vmem:[%s5 + $0xc] sm:$0xf]
    %v188 = vld [vmem:[%s5 + $0x10] sm:$0xf]
    %v189 = vld [vmem:[%s5 + $0x14] sm:$0xf]
    %v190 = vld [vmem:[%s5 + $0x18] sm:$0xf]
    %v191 = vld [vmem:[%s5 + $0x1c] sm:$0xf]
    %v192 = vld [vmem:[%s5 + $0x20] sm:$0xf]
    %v193 = vld [vmem:[%s5 + $0x24] sm:$0xf]
    %v194 = vld [vmem:[%s5 + $0x28] sm:$0xf]
    %v195 = vld [vmem:[%s5 + $0x2c] sm:$0xf]
    %v196 = vld [vmem:[%s5 + $0x30] sm:$0xf]
    %v197 = vld [vmem:[%s5 + $0x34] sm:$0xf]
    %v198 = vld [vmem:[%s5 + $0x38] sm:$0xf]
    %v199 = vld [vmem:[%s5 + $0x3c] sm:$0xf]
    %v200 = vld [vmem:[%s6] sm:$0x1]
    %v202 = vperm.slane %v200, 0
    %v220 = vunpack.c.l.b16 %v184
    %v221 = vunpack.c.l.b16 %v185
    %v222 = vunpack.c.l.b16 %v186
    %v223 = vunpack.c.l.b16 %v187
    %v224 = vunpack.c.l.b16 %v188
    %v225 = vunpack.c.l.b16 %v189
    %v226 = vunpack.c.l.b16 %v190
    %v227 = vunpack.c.l.b16 %v191
    %v228 = vunpack.c.l.b16 %v192
    %v229 = vunpack.c.l.b16 %v193
    %v230 = vunpack.c.l.b16 %v194
    %v231 = vunpack.c.l.b16 %v195
    %v232 = vunpack.c.l.b16 %v196
    %v233 = vunpack.c.l.b16 %v197
    %v234 = vunpack.c.l.b16 %v198
    %v235 = vunpack.c.l.b16 %v199
    %v236 = vpack.c.b16 %v221, %v220
    %v237 = vpack.c.b16 %v223, %v222
    %v238 = vpack.c.b16 %v225, %v224
    %v239 = vpack.c.b16 %v227, %v226
    %v240 = vpack.c.b16 %v229, %v228
    %v241 = vpack.c.b16 %v231, %v230
    %v242 = vpack.c.b16 %v233, %v232
    %v243 = vpack.c.b16 %v235, %v234
    %252 = vmatpush.bf16.msra.mxu0 %v243
    %253 = vmatpush.bf16.msra.mxu0 %v242
    %254 = vmatpush.bf16.msra.mxu0 %v241
    %255 = vmatpush.bf16.msra.mxu0 %v240
    %256 = vmatpush.bf16.msra.mxu0 %v239
    %257 = vmatpush.bf16.msra.mxu0 %v238
    %258 = vmatpush.bf16.msra.mxu0 %v237
    %259 = vmatpush.bf16.msra.mxu0 %v236
    %260 = vmatmul.bf16.gmra.mxu0 %v183
    %v261 = vpop.f32.mrf.mxu0
    %v262 = vadd.f32 %v202, %v261
    %v263 = vpop.f32.mrf.mxu0
    %264 = vdwg.mxu0
    %v265 = vadd.f32 %v141, %v262
    %v266 = vpack.c.bf16 %v265, %v265
    %s267 = scalar_lea.vmem %s3, 16
    %v268 = vld [vmem:[%s267] sm:$0xf]
    %v269 = vld [vmem:[%s267 + $0x4] sm:$0xf]
    %v270 = vld [vmem:[%s267 + $0x8] sm:$0xf]
    %v271 = vld [vmem:[%s267 + $0xc] sm:$0xf]
    %s272 = scalar_lea.vmem %s4, 1
    %v273 = vld [vmem:[%s272] sm:$0x1]
    %v275 = vperm.slane %v273, 0
    %v281 = vunpack.c.l.b16 %v268
    %v282 = vunpack.c.l.b16 %v269
    %v283 = vunpack.c.l.b16 %v270
    %v284 = vunpack.c.l.b16 %v271
    %v285 = vpack.c.b16 %v282, %v281
    %v286 = vpack.c.b16 %v284, %v283
    %v290 = vsel %vm165, %v266, 0
    %292 = vmatpush.bf16.msra.mxu0 0
    %293 = vmatpush.bf16.msra.mxu0 0
    %294 = vmatpush.bf16.msra.mxu0 0
    %295 = vmatpush.bf16.msra.mxu0 0
    %296 = vmatpush.bf16.msra.mxu0 0
    %297 = vmatpush.bf16.msra.mxu0 0
    %298 = vmatpush.bf16.msra.mxu0 %v286
    %299 = vmatpush.bf16.msra.mxu0 %v285
    %300 = vmatmul.bf16.gmra.mxu0 %v290
    %v301 = vpop.f32.mrf.mxu0
    %v302 = vadd.f32 %v275, %v301
    %v303 = vpop.f32.mrf.mxu0
    %304 = vdwg.mxu0
    %v305 = vmax.f32 %v302, 0.0
    %v306 = vpack.c.bf16 %v305, %v305
    %s307 = scalar_lea.vmem %s5, 64
    %v308 = vld [vmem:[%s307] sm:$0xf]
    %v309 = vld [vmem:[%s307 + $0x4] sm:$0xf]
    %v310 = vld [vmem:[%s307 + $0x8] sm:$0xf]
    %v311 = vld [vmem:[%s307 + $0xc] sm:$0xf]
    %v312 = vld [vmem:[%s307 + $0x10] sm:$0xf]
    %v313 = vld [vmem:[%s307 + $0x14] sm:$0xf]
    %v314 = vld [vmem:[%s307 + $0x18] sm:$0xf]
    %v315 = vld [vmem:[%s307 + $0x1c] sm:$0xf]
    %v316 = vld [vmem:[%s307 + $0x20] sm:$0xf]
    %v317 = vld [vmem:[%s307 + $0x24] sm:$0xf]
    %v318 = vld [vmem:[%s307 + $0x28] sm:$0xf]
    %v319 = vld [vmem:[%s307 + $0x2c] sm:$0xf]
    %v320 = vld [vmem:[%s307 + $0x30] sm:$0xf]
    %v321 = vld [vmem:[%s307 + $0x34] sm:$0xf]
    %v322 = vld [vmem:[%s307 + $0x38] sm:$0xf]
    %v323 = vld [vmem:[%s307 + $0x3c] sm:$0xf]
    %s324 = scalar_lea.vmem %s6, 1
    %v325 = vld [vmem:[%s324] sm:$0x1]
    %v327 = vperm.slane %v325, 0
    %v345 = vunpack.c.l.b16 %v308
    %v346 = vunpack.c.l.b16 %v309
    %v347 = vunpack.c.l.b16 %v310
    %v348 = vunpack.c.l.b16 %v311
    %v349 = vunpack.c.l.b16 %v312
    %v350 = vunpack.c.l.b16 %v313
    %v351 = vunpack.c.l.b16 %v314
    %v352 = vunpack.c.l.b16 %v315
    %v353 = vunpack.c.l.b16 %v316
    %v354 = vunpack.c.l.b16 %v317
    %v355 = vunpack.c.l.b16 %v318
    %v356 = vunpack.c.l.b16 %v319
    %v357 = vunpack.c.l.b16 %v320
    %v358 = vunpack.c.l.b16 %v321
    %v359 = vunpack.c.l.b16 %v322
    %v360 = vunpack.c.l.b16 %v323
    %v361 = vpack.c.b16 %v346, %v345
    %v362 = vpack.c.b16 %v348, %v347
    %v363 = vpack.c.b16 %v350, %v349
    %v364 = vpack.c.b16 %v352, %v351
    %v365 = vpack.c.b16 %v354, %v353
    %v366 = vpack.c.b16 %v356, %v355
    %v367 = vpack.c.b16 %v358, %v357
    %v368 = vpack.c.b16 %v360, %v359
    %377 = vmatpush.bf16.msra.mxu0 %v368
    %378 = vmatpush.bf16.msra.mxu0 %v367
    %379 = vmatpush.bf16.msra.mxu0 %v366
    %380 = vmatpush.bf16.msra.mxu0 %v365
    %381 = vmatpush.bf16.msra.mxu0 %v364
    %382 = vmatpush.bf16.msra.mxu0 %v363
    %383 = vmatpush.bf16.msra.mxu0 %v362
    %384 = vmatpush.bf16.msra.mxu0 %v361
    %385 = vmatmul.bf16.gmra.mxu0 %v306
    %v386 = vpop.f32.mrf.mxu0
    %v387 = vadd.f32 %v327, %v386
    %v388 = vpop.f32.mrf.mxu0
    %389 = vdwg.mxu0
    %v390 = vadd.f32 %v265, %v387
    %v391 = vmax.f32 %v390, 0.0
    %v392 = vpack.c.bf16 %v391, %v391
    %v393 = vld [vmem:[%s7] sm:$0xf]
    %v394 = vld [vmem:[%s7 + $0x4] sm:$0xf]
    %v395 = vld [vmem:[%s7 + $0x8] sm:$0xf]
    %v396 = vld [vmem:[%s7 + $0xc] sm:$0xf]
    %v397 = vld [vmem:[%s8] sm:$0x1]
    %v399 = vperm.slane %v397, 0
    %v405 = vunpack.c.l.b16 %v393
    %v406 = vunpack.c.l.b16 %v394
    %v407 = vunpack.c.l.b16 %v395
    %v408 = vunpack.c.l.b16 %v396
    %v409 = vpack.c.b16 %v406, %v405
    %v410 = vpack.c.b16 %v408, %v407
    %v414 = vsel %vm165, %v392, 0
    %416 = vmatpush.bf16.msra.mxu0 0
    %417 = vmatpush.bf16.msra.mxu0 0
    %418 = vmatpush.bf16.msra.mxu0 0
    %419 = vmatpush.bf16.msra.mxu0 0
    %420 = vmatpush.bf16.msra.mxu0 0
    %421 = vmatpush.bf16.msra.mxu0 0
    %422 = vmatpush.bf16.msra.mxu0 %v410
    %423 = vmatpush.bf16.msra.mxu0 %v409
    %424 = vmatmul.bf16.gmra.mxu0 %v414
    %v425 = vpop.f32.mrf.mxu0
    %v426 = vadd.f32 %v399, %v425
    %v427 = vpop.f32.mrf.mxu0
    %428 = vdwg.mxu0
    %vm429 = vcmask 64512
    %430 = vst.msk [vmem:[#allocation2] sm:$0xff] %vm429, %v426
    // Predicated region
    $region38: #{tpu_custom_call.1} parent=1 // pred_check
      _
    $region39: #{tpu_custom_call.1} parent=1 // pred_check_branch
      %432 = sbr.rel (0) target = $region41
    $region40: #{tpu_custom_call.1} parent=1 // pred_region
      %434 = vsyncadd [#allocation3], 0
      %s436 = sshll.u32 [#allocation2], 4
      %s437 = int_to_ptr.vmem [resolvable:$true] %s436
      %s438 = sshll.u32 %s9, 4
      %s439 = int_to_ptr.hbm [resolvable:$true] %s438
      %441 = dma.vmem_to_hbm [thread:$0]  %s437, 128, %s439, [#allocation3]
    $region41: #{tpu_custom_call.1} parent=1 // pred_fallthru
      _
    // Predicated region
    $region42: #{tpu_custom_call.1} parent=1 // pred_check
      _
    $region43: #{tpu_custom_call.1} parent=1 // pred_check_branch
      %443 = sbr.rel (0) target = $region45
    $region44: #{tpu_custom_call.1} parent=1 // pred_region
      %445 = dma.done [#allocation3], 128
    $region45: #{tpu_custom_call.1} parent=1 // pred_fallthru
      _
    %446 = vsyncpa [#allocation3], 1

</llo_original>
